<compile_context>
chip_gen: v5e
topology: v5e:2x2
jax: 0.10.0
libtpu: 0.0.40
codegen_flags: <defaults>
</compile_context>

<pallas_src>
import jax
import jax.numpy as jnp
from jax import lax
from jax.experimental import pallas as pl
from jax.experimental.pallas import tpu as pltpu


def _ffn_kernel(x_ref, w1_ref, b1_ref, w2_ref, b2_ref, o_ref, acc_ref):
    """One (token tile, hidden tile) grid step of  GELU(x@W1 + b1) @ W2 + b2."""
    h_idx = pl.program_id(1)

    @pl.when(h_idx == 0)
    def _init():
        acc_ref[...] = jnp.zeros_like(acc_ref)

    # Linear 1 (MXU, f32 accumulation) + bias slice for this hidden tile.
    h = jnp.dot(x_ref[...], w1_ref[...], preferred_element_type=jnp.float32)
    h = h + b1_ref[...].astype(jnp.float32)

    # Exact (erf-based) GELU -- matches torch.nn.GELU() default.
    # (tanh-approx GELU would move work from the VALU to the otherwise-idle
    #  EUP, but changes numerics; exact erf is kept for parity.)
    inv_sqrt2 = jnp.float32(0.7071067811865476)
    h = 0.5 * h * (1.0 + lax.erf(h * inv_sqrt2))

    # Dropout(p=0.0) is the identity -> not materialized.

    # Linear 2 (MXU): accumulate this hidden tile's contribution in f32.
    acc_ref[...] += jnp.dot(h.astype(w2_ref.dtype), w2_ref[...],
                            preferred_element_type=jnp.float32)

    @pl.when(h_idx == pl.num_programs(1) - 1)
    def _finalize():
        o_ref[...] = (acc_ref[...] + b2_ref[...].astype(jnp.float32)
                      ).astype(o_ref.dtype)


def _round_up(x, n):
    return ((x + n - 1) // n) * n


def feed_forward(x, w1, b1, w2, b2, *, block_tokens=None, block_hidden=None,
                 vmem_budget_bytes=40 * 1024 * 1024):
    """Fused FFN.

    x:  (..., dim)
    w1: (dim, hidden)   == torch nn.Linear(dim, hidden).weight.T
    b1: (hidden,)
    w2: (hidden, dim)   == torch nn.Linear(hidden, dim).weight.T
    b2: (dim,)
    """
    orig_shape = x.shape
    dim = orig_shape[-1]
    hidden = w1.shape[1]
    assert w1.shape == (dim, hidden) and w2.shape == (hidden, dim)

    x2d = x.reshape(-1, dim)
    m = x2d.shape[0]

    x_bytes = x2d.dtype.itemsize
    w_bytes = w1.dtype.itemsize
    o_bytes = x_bytes
    acc_bytes = 4  # f32 accumulator / intermediates

    # ---- hidden (reduction) tile --------------------------------------------
    if block_hidden is not None:
        th = int(block_hidden)
        assert hidden % th == 0 and (th == hidden or th % 128 == 0), (th, hidden)
    else:
        resident_w = (2 * dim * hidden + hidden + dim) * w_bytes
        if resident_w <= vmem_budget_bytes // 2 or hidden % 128 != 0:
            th = hidden                      # weights fully resident
        else:
            th = hidden                      # fallback if no 128-aligned divisor fits
            cand = (hidden // 128) * 128
            while cand >= 128:
                if (hidden % cand == 0 and
                        2 * (2 * dim * cand + cand) * w_bytes <= vmem_budget_bytes // 2):
                    th = cand
                    break
                cand -= 128
    n_h = hidden // th

    w_nbuf = 1 if n_h == 1 else 2            # streamed weight tiles double-buffered
    weight_vmem = w_nbuf * (2 * dim * th + th) * w_bytes + dim * w_bytes

    # ---- token tile -----------------------------------------------------------
    tm = 256 if block_tokens is None else int(block_tokens)
    tm = max(8, min(_round_up(tm, 8), _round_up(m, 8)))

    def _tok_vmem(t):
        return t * (2 * dim * x_bytes        # x tile (double-buffered)
                    + 2 * dim * o_bytes      # out tile (double-buffered)
                    + dim * acc_bytes        # f32 accumulator scratch
                    + th * acc_bytes)        # f32 hidden intermediate

    while tm > 8 and weight_vmem + _tok_vmem(tm) > vmem_budget_bytes:
        tm = max(8, _round_up(tm // 2, 8))
    n_m = -(-m // tm)                        # cdiv; tail block rows are masked

    est_bytes = weight_vmem + _tok_vmem(tm)
    vmem_limit = int(min(112 * 1024 * 1024,
                         est_bytes + max(16 * 1024 * 1024, est_bytes // 4)))

    b1r = b1.reshape(1, hidden)
    b2r = b2.reshape(1, dim)

    def _spec(shape, index_map, *, single=False):
        if single:
            # Constant block index -> no benefit from double-buffering.
            return pl.BlockSpec(shape, index_map, pipeline_mode=pl.Buffered(1))
        return pl.BlockSpec(shape, index_map)

    resident = (n_h == 1)

    out = pl.pallas_call(
        _ffn_kernel,
        out_shape=jax.ShapeDtypeStruct((m, dim), x.dtype),
        grid_spec=pltpu.PrefetchScalarGridSpec(
            num_scalar_prefetch=0,
            grid=(n_m, n_h),
            in_specs=[
                pl.BlockSpec((tm, dim), lambda i, h: (i, 0)),             # x tile
                _spec((dim, th), lambda i, h: (0, h), single=resident),   # W1
                _spec((1, th), lambda i, h: (0, h), single=resident),     # b1
                _spec((th, dim), lambda i, h: (h, 0), single=resident),   # W2
                _spec((1, dim), lambda i, h: (0, 0), single=True),        # b2
            ],
            out_specs=pl.BlockSpec((tm, dim), lambda i, h: (i, 0)),
            scratch_shapes=[pltpu.VMEM((tm, dim), jnp.float32)],
        ),
        compiler_params=pltpu.CompilerParams(
            dimension_semantics=("parallel", "arbitrary"),
            vmem_limit_bytes=vmem_limit),
    )(x2d, w1, b1r, w2, b2r)

    return out.reshape(orig_shape)


def _reference_ffn(x, w1, b1, w2, b2):
    h = x @ w1 + b1
    h = 0.5 * h * (1.0 + lax.erf(h * 0.7071067811865476))
    return h @ w2 + b2


if __name__ == "__main__":
    # Small shapes consistent with the module: tokens = batch * seq.
    B, S, DIM, HIDDEN = 2, 8, 32, 64

    key = jax.random.PRNGKey(0)
    kx, kw1, kb1, kw2, kb2 = jax.random.split(key, 5)

    x = jax.random.normal(kx, (B, S, DIM), dtype=jnp.float32)

    bound1 = 1.0 / jnp.sqrt(DIM)
    bound2 = 1.0 / jnp.sqrt(HIDDEN)
    w1 = jax.random.uniform(kw1, (DIM, HIDDEN), jnp.float32, -bound1, bound1)
    b1 = jax.random.uniform(kb1, (HIDDEN,), jnp.float32, -bound1, bound1)
    w2 = jax.random.uniform(kw2, (HIDDEN, DIM), jnp.float32, -bound2, bound2)
    b2 = jax.random.uniform(kb2, (DIM,), jnp.float32, -bound2, bound2)

    ref = _reference_ffn(x, w1, b1, w2, b2)

    # 1) f32, weights fully resident (single hidden step, single-buffered).
    out = feed_forward(x, w1, b1, w2, b2)
    jax.block_until_ready(out)
    assert out.shape == x.shape, (out.shape, x.shape)
    assert jnp.allclose(out, ref, atol=1e-4, rtol=1e-4), float(
        jnp.max(jnp.abs(out - ref)))

    # 2) Hidden-tiled accumulator path (grid hidden axis > 1).
    HIDDEN2 = 256
    bound2b = 1.0 / jnp.sqrt(HIDDEN2)
    w1b = jax.random.uniform(kw1, (DIM, HIDDEN2), jnp.float32, -bound1, bound1)
    b1b = jax.random.uniform(kb1, (HIDDEN2,), jnp.float32, -bound1, bound1)
    w2b = jax.random.uniform(kw2, (HIDDEN2, DIM), jnp.float32, -bound2b, bound2b)
    b2b = jax.random.uniform(kb2, (DIM,), jnp.float32, -bound2b, bound2b)
    out2 = feed_forward(x, w1b, b1b, w2b, b2b, block_hidden=128)
    jax.block_until_ready(out2)
    ref2 = _reference_ffn(x, w1b, b1b, w2b, b2b)
    assert jnp.allclose(out2, ref2, atol=1e-4, rtol=1e-4), float(
        jnp.max(jnp.abs(out2 - ref2)))

    # 3) Tail-masked token tile (token count not a multiple of the token block).
    x3 = jax.random.normal(kx, (3, 5, DIM), dtype=jnp.float32)
    out3 = feed_forward(x3, w1, b1, w2, b2, block_tokens=8)
    jax.block_until_ready(out3)
    ref3 = _reference_ffn(x3, w1, b1, w2, b2)
    assert jnp.allclose(out3, ref3, atol=1e-4, rtol=1e-4), float(
        jnp.max(jnp.abs(out3 - ref3)))

    # 4) bf16 operands (MXU-friendly on v5e/v6e/v7x) with f32 accumulation.
    xb = x.astype(jnp.bfloat16)
    outb = feed_forward(xb,
                        w1.astype(jnp.bfloat16), b1.astype(jnp.bfloat16),
                        w2.astype(jnp.bfloat16), b2.astype(jnp.bfloat16))
    jax.block_until_ready(outb)
    assert outb.dtype == jnp.bfloat16
    assert jnp.allclose(outb.astype(jnp.float32), ref, atol=1e-1, rtol=1e-1)

    print("KERNEL_OK")
</pallas_src>

<mosaic_0001>
module attributes {stable_mosaic.version = 11 : i64} {
  func.func @_ffn_kernel(%arg0: i32, %arg1: i32, %arg2: memref<16x32xf32, #tpu.memory_space<vmem>>, %arg3: memref<32x64xf32, #tpu.memory_space<vmem>>, %arg4: memref<1x64xf32, #tpu.memory_space<vmem>>, %arg5: memref<64x32xf32, #tpu.memory_space<vmem>>, %arg6: memref<1x32xf32, #tpu.memory_space<vmem>>, %arg7: memref<16x32xf32, #tpu.memory_space<vmem>>, %arg8: memref<16x32xf32, #tpu.memory_space<vmem>>) attributes {dimension_semantics = [#tpu.dimension_semantics<parallel>, #tpu.dimension_semantics<arbitrary>], iteration_bounds = array<i64: 1, 1>, scalar_prefetch = 0 : i64, scratch_operands = 1 : i64, tpu.core_type = #tpu.core_type<tc>, window_params = [{transform_indices = @transform_0, window_bounds = array<i64: 16, 32>}, {pipeline_mode = #tpu.pipeline_mode<synchronous>, transform_indices = @transform_1, window_bounds = array<i64: 32, 64>}, {pipeline_mode = #tpu.pipeline_mode<synchronous>, transform_indices = @transform_2, window_bounds = array<i64: 1, 64>}, {pipeline_mode = #tpu.pipeline_mode<synchronous>, transform_indices = @transform_3, window_bounds = array<i64: 64, 32>}, {pipeline_mode = #tpu.pipeline_mode<synchronous>, transform_indices = @transform_4, window_bounds = array<i64: 1, 32>}, {transform_indices = @transform_5, window_bounds = array<i64: 16, 32>}]} {
    %c0_i32 = arith.constant 0 : i32
    %0 = arith.cmpi eq, %arg1, %c0_i32 : i32
    %1 = arith.extui %0 : i1 to i32
    %c0_i32_0 = arith.constant 0 : i32
    %2 = arith.cmpi ne, %1, %c0_i32_0 : i32
    scf.if %2 {
      %cst_18 = arith.constant 0.000000e+00 : f32
      %25 = vector.broadcast %cst_18 : f32 to vector<16x32xf32>
      %c0_19 = arith.constant 0 : index
      %c0_20 = arith.constant 0 : index
      %26 = vector.load %arg8[%c0_19, %c0_20] : memref<16x32xf32, #tpu.memory_space<vmem>>, vector<16x32xf32>
      tpu.vector_store %arg8[%c0_19, %c0_20], %25 {strides = array<i32>} : memref<16x32xf32, #tpu.memory_space<vmem>>, vector<16x32xf32>,
    } else {
    }
    %c0 = arith.constant 0 : index
    %c0_1 = arith.constant 0 : index
    %3 = vector.load %arg2[%c0, %c0_1] : memref<16x32xf32, #tpu.memory_space<vmem>>, vector<16x32xf32>
    %c0_2 = arith.constant 0 : index
    %c0_3 = arith.constant 0 : index
    %4 = vector.load %arg3[%c0_2, %c0_3] : memref<32x64xf32, #tpu.memory_space<vmem>>, vector<32x64xf32>
    %cst = arith.constant dense<0.000000e+00> : vector<16x64xf32>
    %5 = tpu.matmul %3, %4, %cst {dimension_numbers = #tpu.dot_dimension_numbers<[1], [0], [0], [1], [0, 0, 1, 1], [], []>} : vector<16x32xf32>, vector<32x64xf32>, vector<16x64xf32> -> vector<16x64xf32>
    %c0_4 = arith.constant 0 : index
    %c0_5 = arith.constant 0 : index
    %6 = vector.load %arg4[%c0_4, %c0_5] : memref<1x64xf32, #tpu.memory_space<vmem>>, vector<1x64xf32>
    %7 = vector.broadcast %6 : vector<1x64xf32> to vector<16x64xf32>
    %8 = arith.addf %5, %7 : vector<16x64xf32>
    %cst_6 = arith.constant 5.000000e-01 : f32
    %9 = vector.broadcast %cst_6 : f32 to vector<16x64xf32>
    %10 = arith.mulf %9, %8 : vector<16x64xf32>
    %cst_7 = arith.constant 0.707106769 : f32
    %11 = vector.broadcast %cst_7 : f32 to vector<16x64xf32>
    %12 = arith.mulf %8, %11 : vector<16x64xf32>
    %13 = math.erf %12 : vector<16x64xf32>
    %cst_8 = arith.constant 1.000000e+00 : f32
    %14 = vector.broadcast %cst_8 : f32 to vector<16x64xf32>
    %15 = arith.addf %14, %13 : vector<16x64xf32>
    %16 = arith.mulf %10, %15 : vector<16x64xf32>
    %c0_9 = arith.constant 0 : index
    %c0_10 = arith.constant 0 : index
    %17 = vector.load %arg8[%c0_9, %c0_10] : memref<16x32xf32, #tpu.memory_space<vmem>>, vector<16x32xf32>
    %c0_11 = arith.constant 0 : index
    %c0_12 = arith.constant 0 : index
    %18 = vector.load %arg5[%c0_11, %c0_12] : memref<64x32xf32, #tpu.memory_space<vmem>>, vector<64x32xf32>
    %cst_13 = arith.constant dense<0.000000e+00> : vector<16x32xf32>
    %19 = tpu.matmul %16, %18, %cst_13 {dimension_numbers = #tpu.dot_dimension_numbers<[1], [0], [0], [1], [0, 0, 1, 1], [], []>} : vector<16x64xf32>, vector<64x32xf32>, vector<16x32xf32> -> vector<16x32xf32>
    %20 = arith.addf %17, %19 : vector<16x32xf32>
    %c0_14 = arith.constant 0 : index
    %c0_15 = arith.constant 0 : index
    %21 = vector.load %arg8[%c0_14, %c0_15] : memref<16x32xf32, #tpu.memory_space<vmem>>, vector<16x32xf32>
    tpu.vector_store %arg8[%c0_14, %c0_15], %20 {strides = array<i32>} : memref<16x32xf32, #tpu.memory_space<vmem>>, vector<16x32xf32>,
    %c0_i32_16 = arith.constant 0 : i32
    %22 = arith.cmpi eq, %arg1, %c0_i32_16 : i32
    %23 = arith.extui %22 : i1 to i32
    %c0_i32_17 = arith.constant 0 : i32
    %24 = arith.cmpi ne, %23, %c0_i32_17 : i32
    scf.if %24 {
      %c0_18 = arith.constant 0 : index
      %c0_19 = arith.constant 0 : index
      %25 = vector.load %arg8[%c0_18, %c0_19] : memref<16x32xf32, #tpu.memory_space<vmem>>, vector<16x32xf32>
      %c0_20 = arith.constant 0 : index
      %c0_21 = arith.constant 0 : index
      %26 = vector.load %arg6[%c0_20, %c0_21] : memref<1x32xf32, #tpu.memory_space<vmem>>, vector<1x32xf32>
      %27 = vector.broadcast %26 : vector<1x32xf32> to vector<16x32xf32>
      %28 = arith.addf %25, %27 : vector<16x32xf32>
      %c0_22 = arith.constant 0 : index
      %c0_23 = arith.constant 0 : index
      %29 = vector.load %arg7[%c0_22, %c0_23] : memref<16x32xf32, #tpu.memory_space<vmem>>, vector<16x32xf32>
      tpu.vector_store %arg7[%c0_22, %c0_23], %28 {strides = array<i32>} : memref<16x32xf32, #tpu.memory_space<vmem>>, vector<16x32xf32>,
    } else {
    }
    return
  }
  func.func @transform_0(%arg0: i32, %arg1: i32) -> (i32, i32) {
    %c0_i32 = arith.constant 0 : i32
    %c0_i32_0 = arith.constant 0 : i32
    return %arg0, %c0_i32 : i32, i32
  }
  func.func @transform_1(%arg0: i32, %arg1: i32) -> (i32, i32) {
    %c0_i32 = arith.constant 0 : i32
    %c0_i32_0 = arith.constant 0 : i32
    return %c0_i32, %arg1 : i32, i32
  }
  func.func @transform_2(%arg0: i32, %arg1: i32) -> (i32, i32) {
    %c0_i32 = arith.constant 0 : i32
    %c0_i32_0 = arith.constant 0 : i32
    return %c0_i32, %arg1 : i32, i32
  }
  func.func @transform_3(%arg0: i32, %arg1: i32) -> (i32, i32) {
    %c0_i32 = arith.constant 0 : i32
    %c0_i32_0 = arith.constant 0 : i32
    return %arg1, %c0_i32 : i32, i32
  }
  func.func @transform_4(%arg0: i32, %arg1: i32) -> (i32, i32) {
    %c0_i32 = arith.constant 0 : i32
    %c0_i32_0 = arith.constant 0 : i32
    %c0_i32_1 = arith.constant 0 : i32
    return %c0_i32, %c0_i32_0 : i32, i32
  }
  func.func @transform_5(%arg0: i32, %arg1: i32) -> (i32, i32) {
    %c0_i32 = arith.constant 0 : i32
    %c0_i32_0 = arith.constant 0 : i32
    return %arg0, %c0_i32 : i32, i32
  }
}

</mosaic_0001>

<llo_original>
// kernel: tpu_custom_call.1
$region0: #{tpu_custom_call.1}
  #allocation0 [shape = 'u32[]', space=smem, size = 0x4, offset = 0x4, fixed_abs, tag = 'smem constant byte address 0x4 - core index']
  #allocation1 [shape = 'u32[72,128]{1,0:T(1,128)}', space=vmem, size = 0x9000, scoped, tag = 'internal scratch']
  #allocation2 [shape = 'f32[16,32]{1,0:T(8,128)}', space=vmem, size = 0x2000, scoped, tag = 'scratch operand']
  %s0 = inlined_call_operand.vmem [shape: f32[16,32], index: 0, kind: input, shape index: {}]
  %s1 = inlined_call_operand.vmem [shape: f32[32,64], index: 1, kind: input, shape index: {}]
  %s2 = inlined_call_operand.vmem [shape: f32[1,64], index: 2, kind: input, shape index: {}]
  %s3 = inlined_call_operand.vmem [shape: f32[64,32], index: 3, kind: input, shape index: {}]
  %s4 = inlined_call_operand.vmem [shape: f32[1,32], index: 4, kind: input, shape index: {}]
  %s5 = inlined_call_operand.hbm [shape: f32[16,32], index: 5, kind: output, shape index: {}]
  %s6 = sld [smem:[#allocation0]]
  $region38: #{tpu_custom_call.1} parent=0
    _
  %s8 = ssub.s32 1, %s6
  %s9 = scalar_select 0, %s8, %s6
  $region1: #{tpu_custom_call.1} parent=0
    #allocation3 [shape = 'u8[8192]{0}', space=vmem, size = 0x2000, scoped, tag = 'output window, operand 0, single buffered']
    #allocation4 [shape = 's32[1]{0}', space=sflag, size = 0x4, scoped, tag = 'scoped memory for tpu_custom_call.1']
    %10 = vsyncpa [#allocation4], 0
    // Predicated region
    $region2: #{tpu_custom_call.1} parent=1 // pred_check
      _
    $region3: #{tpu_custom_call.1} parent=1 // pred_check_branch
      %12 = sbr.rel (0) target = $region5
    $region4: #{tpu_custom_call.1} parent=1 // pred_region
      _
    $region5: #{tpu_custom_call.1} parent=1 // pred_fallthru
      _
    // Predicated region
    $region6: #{tpu_custom_call.1} parent=1 // pred_check
      _
    $region7: #{tpu_custom_call.1} parent=1 // pred_check_branch
      %14 = sbr.rel (0) target = $region9
    $region8: #{tpu_custom_call.1} parent=1 // pred_region
      _
    $region9: #{tpu_custom_call.1} parent=1 // pred_fallthru
      _
    // Predicated region
    $region10: #{tpu_custom_call.1} parent=1 // pred_check
      _
    $region11: #{tpu_custom_call.1} parent=1 // pred_check_branch
      %16 = sbr.rel (0) target = $region13
    $region12: #{tpu_custom_call.1} parent=1 // pred_region
      _
    $region13: #{tpu_custom_call.1} parent=1 // pred_fallthru
      _
    // Predicated region
    $region14: #{tpu_custom_call.1} parent=1 // pred_check
      _
    $region15: #{tpu_custom_call.1} parent=1 // pred_check_branch
      %18 = sbr.rel (0) target = $region17
    $region16: #{tpu_custom_call.1} parent=1 // pred_region
      _
    $region17: #{tpu_custom_call.1} parent=1 // pred_fallthru
      _
    // Predicated region
    $region18: #{tpu_custom_call.1} parent=1 // pred_check
      _
    $region19: #{tpu_custom_call.1} parent=1 // pred_check_branch
      %20 = sbr.rel (0) target = $region21
    $region20: #{tpu_custom_call.1} parent=1 // pred_region
      _
    $region21: #{tpu_custom_call.1} parent=1 // pred_fallthru
      _
    %p21 = scmp.eq.s32.totalorder 0, 0
    // Predicated region
    $region22: #{tpu_custom_call.1} parent=1 // pred_check
      %p22 = pneg %p21
    $region23: #{tpu_custom_call.1} parent=1 // pred_check_branch
      %24 = sbr.rel (%p22) target = $region25
    $region24: #{tpu_custom_call.1} parent=1 // pred_region
      %vm25 = vcmask 261120
      %26 = vst.msk [vmem:[#allocation2] sm:$0xff] %vm25, 0.0
      %27 = vst.msk [vmem:[#allocation2 + $0x8] sm:$0xff] %vm25, 0.0
    $region25: #{tpu_custom_call.1} parent=1 // pred_fallthru
      _
    %v28 = vld [vmem:[%s0] sm:$0xff]
    %v29 = vld [vmem:[%s0 + $0x8] sm:$0xff]
    %v30 = vld [vmem:[%s1] sm:$0xff]
    %v31 = vld [vmem:[%s1 + $0x8] sm:$0xff]
    %v32 = vld [vmem:[%s1 + $0x10] sm:$0xff]
    %v33 = vld [vmem:[%s1 + $0x18] sm:$0xff]
    %v34 = vld [vmem:[%s2] sm:$0x1]
    %v36 = vperm.slane %v34, 0
    %vm38 = vcmask 261120
    %v40 = vsel %vm38, %v28, 0
    %v43 = vsel %vm38, %v29, 0
    %45 = vmatpush.msra.mxu0 0.0
    %46 = vmatpush.msra.mxu0 0.0
    %47 = vmatpush.msra.mxu0 0.0
    %48 = vmatpush.msra.mxu0 0.0
    %49 = vmatpush.msra.mxu0 0.0
    %50 = vmatpush.msra.mxu0 0.0
    %51 = vmatpush.msra.mxu0 0.0
    %52 = vmatpush.msra.mxu0 0.0
    %53 = vmatpush.msra.mxu0 0.0
    %54 = vmatpush.msra.mxu0 0.0
    %55 = vmatpush.msra.mxu0 0.0
    %56 = vmatpush.msra.mxu0 0.0
    %57 = vmatpush.msra.mxu0 %v33
    %58 = vmatpush.msra.mxu0 %v32
    %59 = vmatpush.msra.mxu0 %v31
    %60 = vmatpush.msra.mxu0 %v30
    %61 = vmatmul.f32.gmra.mxu0 %v40
    %v62 = vpop.f32.mrf.mxu0
    %v63 = vadd.f32 %v36, %v62
    %64 = vmatmul.f32.gmra.mxu0 %v43
    %v65 = vpop.f32.mrf.mxu0
    %v66 = vadd.f32 %v36, %v65
    %67 = vdwg.mxu0
    %v68 = vmul.f32 %v63, 0.5
    %v69 = vmul.f32 %v66, 0.5
    %v70 = vmul.f32 %v63, 0.70710677
    %v71 = vmul.f32 %v66, 0.70710677
    %v72 = vmul.f32 %v70, %v70
    %v73 = vmin.f32 16.0, %v72
    %v74 = vmul.f32 %v73, 2.1237322e-06
    %v75 = vadd.f32 %v74, 0.00028619796
    %v76 = vmul.f32 %v73, %v75
    %v77 = vadd.f32 %v76, 0.0036580483
    %v78 = vmul.f32 %v73, %v77
    %v79 = vadd.f32 %v78, 0.05243302
    %v80 = vmul.f32 %v73, %v79
    %v81 = vadd.f32 %v80, 0.18741608
    %v82 = vmul.f32 %v73, %v81
    %v83 = vadd.f32 %v82, 1.1283791
    %v84 = vmul.f32 %v70, %v83
    %v85 = vmul.f32 %v73, 3.8918573e-05
    %v86 = vadd.f32 %v85, 0.001143296
    %v87 = vmul.f32 %v73, %v86
    %v88 = vadd.f32 %v87, 0.014752088
    %v89 = vmul.f32 %v73, %v88
    %v90 = vadd.f32 %v89, 0.112945676
    %v91 = vmul.f32 %v73, %v90
    %v92 = vadd.f32 %v91, 0.4994258
    %v93 = vmul.f32 %v73, %v92
    %v94 = vadd.f32 %v93, 1.0
    %v95 = vrcp.pop %v94
    %v96 = vmul.f32 %v94, %v95
    %v97 = vsub.f32 1.0, %v96
    %v98 = vmul.f32 %v95, %v97
    %v99 = vadd.f32 %v95, %v98
    %vm100 = vweird.f32 %v94
    %vm101 = vweird.f32 %v95
    %vm102 = vmor %vm100, %vm101
    %v103 = vsel %vm102, %v95, %v99
    %v104 = vand.u32 2147483647, %v94
    %vm105 = vcmp.eq.f32.partialorder %v104, 8.507059e+37
    %v106 = vand.u32 %v94, 2147483648
    %v107 = vor.u32 1.1754944e-38, %v106
    %v108 = vsel %vm105, %v107, %v103
    %v109 = vmul.f32 %v84, %v108
    %v110 = vmin.f32 %v109, 1.0
    %v111 = vmax.f32 %v110, -1.0
    %v112 = vmul.f32 %v71, %v71
    %v113 = vmin.f32 16.0, %v112
    %v114 = vmul.f32 %v113, 2.1237322e-06
    %v115 = vadd.f32 %v114, 0.00028619796
    %v116 = vmul.f32 %v113, %v115
    %v117 = vadd.f32 %v116, 0.0036580483
    %v118 = vmul.f32 %v113, %v117
    %v119 = vadd.f32 %v118, 0.05243302
    %v120 = vmul.f32 %v113, %v119
    %v121 = vadd.f32 %v120, 0.18741608
    %v122 = vmul.f32 %v113, %v121
    %v123 = vadd.f32 %v122, 1.1283791
    %v124 = vmul.f32 %v71, %v123
    %v125 = vmul.f32 %v113, 3.8918573e-05
    %v126 = vadd.f32 %v125, 0.001143296
    %v127 = vmul.f32 %v113, %v126
    %v128 = vadd.f32 %v127, 0.014752088
    %v129 = vmul.f32 %v113, %v128
    %v130 = vadd.f32 %v129, 0.112945676
    %v131 = vmul.f32 %v113, %v130
    %v132 = vadd.f32 %v131, 0.4994258
    %v133 = vmul.f32 %v113, %v132
    %v134 = vadd.f32 %v133, 1.0
    %v135 = vrcp.pop %v134
    %v136 = vmul.f32 %v134, %v135
    %v137 = vsub.f32 1.0, %v136
    %v138 = vmul.f32 %v135, %v137
    %v139 = vadd.f32 %v135, %v138
    %vm140 = vweird.f32 %v134
    %vm141 = vweird.f32 %v135
    %vm142 = vmor %vm140, %vm141
    %v143 = vsel %vm142, %v135, %v139
    %v144 = vand.u32 2147483647, %v134
    %vm145 = vcmp.eq.f32.partialorder %v144, 8.507059e+37
    %v146 = vand.u32 %v134, 2147483648
    %v147 = vor.u32 1.1754944e-38, %v146
    %v148 = vsel %vm145, %v147, %v143
    %v149 = vmul.f32 %v124, %v148
    %v150 = vmin.f32 %v149, 1.0
    %v151 = vmax.f32 %v150, -1.0
    %v152 = vadd.f32 %v111, 1.0
    %v153 = vadd.f32 %v151, 1.0
    %v154 = vmul.f32 %v68, %v152
    %v155 = vmul.f32 %v69, %v153
    %v156 = vld [vmem:[#allocation2] sm:$0xff]
    %v157 = vld [vmem:[#allocation2 + $0x8] sm:$0xff]
    %v158 = vld [vmem:[%s3] sm:$0xff]
    %v159 = vld [vmem:[%s3 + $0x8] sm:$0xff]
    %v160 = vld [vmem:[%s3 + $0x10] sm:$0xff]
    %v161 = vld [vmem:[%s3 + $0x18] sm:$0xff]
    %v162 = vld [vmem:[%s3 + $0x20] sm:$0xff]
    %v163 = vld [vmem:[%s3 + $0x28] sm:$0xff]
    %v164 = vld [vmem:[%s3 + $0x30] sm:$0xff]
    %v165 = vld [vmem:[%s3 + $0x38] sm:$0xff]
    %vm166 = vcmask 523264
    %v168 = vsel %vm166, %v154, 0
    %v171 = vsel %vm166, %v155, 0
    %173 = vmatpush.msra.mxu0 0.0
    %174 = vmatpush.msra.mxu0 0.0
    %175 = vmatpush.msra.mxu0 0.0
    %176 = vmatpush.msra.mxu0 0.0
    %177 = vmatpush.msra.mxu0 0.0
    %178 = vmatpush.msra.mxu0 0.0
    %179 = vmatpush.msra.mxu0 0.0
    %180 = vmatpush.msra.mxu0 0.0
    %181 = vmatpush.msra.mxu0 %v165
    %182 = vmatpush.msra.mxu0 %v164
    %183 = vmatpush.msra.mxu0 %v163
    %184 = vmatpush.msra.mxu0 %v162
    %185 = vmatpush.msra.mxu0 %v161
    %186 = vmatpush.msra.mxu0 %v160
    %187 = vmatpush.msra.mxu0 %v159
    %188 = vmatpush.msra.mxu0 %v158
    %189 = vmatmul.f32.gmra.mxu0 %v168
    %v190 = vpop.f32.mrf.mxu0
    %v191 = vadd.f32 0.0, %v190
    %192 = vmatmul.f32.gmra.mxu0 %v171
    %v193 = vpop.f32.mrf.mxu0
    %v194 = vadd.f32 0.0, %v193
    %195 = vdwg.mxu0
    %v196 = vadd.f32 %v156, %v191
    %v197 = vadd.f32 %v157, %v194
    %198 = vst.msk [vmem:[#allocation2] sm:$0xff] %vm38, %v196
    %199 = vst.msk [vmem:[#allocation2 + $0x8] sm:$0xff] %vm38, %v197
    // Predicated region
    $region26: #{tpu_custom_call.1} parent=1 // pred_check
      %p200 = pneg %p21
    $region27: #{tpu_custom_call.1} parent=1 // pred_check_branch
      %202 = sbr.rel (%p200) target = $region29
    $region28: #{tpu_custom_call.1} parent=1 // pred_region
      %v203 = vld [vmem:[#allocation2] sm:$0xff]
      %v204 = vld [vmem:[#allocation2 + $0x8] sm:$0xff]
      %v205 = vld [vmem:[%s4] sm:$0x1]
      %v207 = vperm.slane %v205, 0
      %v209 = vadd.f32 %v203, %v207
      %v210 = vadd.f32 %v204, %v207
      %211 = vst.msk [vmem:[#allocation3] sm:$0xff] %vm38, %v209
      %212 = vst.msk [vmem:[#allocation3 + $0x8] sm:$0xff] %vm38, %v210
    $region29: #{tpu_custom_call.1} parent=1 // pred_fallthru
      _
    // Predicated region
    $region30: #{tpu_custom_call.1} parent=1 // pred_check
      _
    $region31: #{tpu_custom_call.1} parent=1 // pred_check_branch
      %214 = sbr.rel (0) target = $region33
    $region32: #{tpu_custom_call.1} parent=1 // pred_region
      %216 = vsyncadd [#allocation4], 0
      %s217 = sshll.u32 [#allocation3], 4
      %s218 = int_to_ptr.vmem [resolvable:$true] %s217
      %s219 = sshll.u32 %s5, 4
      %s220 = int_to_ptr.hbm [resolvable:$true] %s219
      %225 = dma.vmem_to_hbm [thread:$0]  %s218, 256, %s220, [#allocation4], 128, 128, 8
    $region33: #{tpu_custom_call.1} parent=1 // pred_fallthru
      _
    // Predicated region
    $region34: #{tpu_custom_call.1} parent=1 // pred_check
      _
    $region35: #{tpu_custom_call.1} parent=1 // pred_check_branch
      %227 = sbr.rel (0) target = $region37
    $region36: #{tpu_custom_call.1} parent=1 // pred_region
      %229 = dma.done [#allocation4], 256
    $region37: #{tpu_custom_call.1} parent=1 // pred_fallthru
      _
    %230 = vsyncpa [#allocation4], 1

</llo_original>
